<compile_context>
chip_gen: v7x
topology: tpu7x:2x2x1
jax: 0.10.0
libtpu: 0.0.40
codegen_flags: <defaults>
</compile_context>

<pallas_src>
import jax
import jax.numpy as jnp
from jax.experimental import pallas as pl
from jax.experimental.pallas import tpu as pltpu


def _round_up(x, m):
    return (x + m - 1) // m * m


def _pad_2d(x, rows, cols):
    pr, pc = rows - x.shape[0], cols - x.shape[1]
    return jnp.pad(x, ((0, pr), (0, pc)))


def _vmem_limit_bytes():
    # Per-generation VMEM budget: ~75% of physical per-TC VMEM, capped at 96 MiB
    # (v6e/v5e: 128 MiB -> 96 MiB; v7x: 64 MiB -> 48 MiB). Safe fallback 48 MiB.
    try:
        cap = pltpu.get_tpu_info().vmem_capacity_bytes
        return min(int(cap * 3 // 4), 96 * 1024 * 1024)
    except Exception:
        return 48 * 1024 * 1024


# --------------------------------------------------------------------------
# Kernel 1: per-relation linear projection  Wh[r] = X[r] @ W[r]
# --------------------------------------------------------------------------
def _wh_kernel(x_ref, w_ref, wh_ref):
    """Grid = (relation r, src_tile s).

    x_ref:  (1, TS, D_in_p)    bf16 source-feature tile of relation r
    w_ref:  (1, D_in_p, D_out_p) bf16 linear weight of relation r
    wh_ref: (1, TS, D_out_p)   bf16 projected features (cast once at store)
    """
    wh_ref[0] = jnp.dot(
        x_ref[0], w_ref[0], preferred_element_type=jnp.float32
    ).astype(wh_ref.dtype)


def project_features_pallas(x_stack, w_stack, *, tile_src, vmem_limit):
    R, n_src_p, d_in_p = x_stack.shape
    d_out_p = w_stack.shape[2]
    assert n_src_p % tile_src == 0
    grid = (R, n_src_p // tile_src)

    flops = 2 * R * n_src_p * d_in_p * d_out_p
    bytes_accessed = 2 * (x_stack.size + w_stack.size + R * n_src_p * d_out_p)

    return pl.pallas_call(
        _wh_kernel,
        out_shape=jax.ShapeDtypeStruct((R, n_src_p, d_out_p), jnp.bfloat16),
        grid_spec=pltpu.PrefetchScalarGridSpec(
            num_scalar_prefetch=0,
            grid=grid,
            in_specs=[
                pl.BlockSpec((1, tile_src, d_in_p), lambda r, s: (r, s, 0)),
                pl.BlockSpec((1, d_in_p, d_out_p), lambda r, s: (r, 0, 0)),
            ],
            out_specs=pl.BlockSpec((1, tile_src, d_out_p), lambda r, s: (r, s, 0)),
        ),
        compiler_params=pltpu.CompilerParams(
            dimension_semantics=("parallel", "parallel"),
            vmem_limit_bytes=vmem_limit,
        ),
        cost_estimate=pl.CostEstimate(
            flops=flops, transcendentals=0, bytes_accessed=bytes_accessed
        ),
    )(x_stack, w_stack)


# --------------------------------------------------------------------------
# Kernel 2: mean-aggregation + cross-relation sum  out[i] += A[r,i,s] @ Wh[r,s]
# --------------------------------------------------------------------------
def _agg_kernel(a_ref, wh_ref, o_ref):
    """Grid = (dst_tile i, relation r, src_tile s); (r, s) are trailing
    reduction axes; the f32 output block stays resident across them.

    a_ref:  (1, TD, TS)       bf16 mean-normalized adjacency tile of relation r
    wh_ref: (1, TS, D_out_p)  bf16 projected source features of relation r
    o_ref:  (TD, D_out_p)     f32 accumulator / output block
    """
    r = pl.program_id(1)
    s = pl.program_id(2)

    @pl.when(jnp.logical_and(r == 0, s == 0))
    def _():
        o_ref[...] = jnp.zeros_like(o_ref)

    o_ref[...] += jnp.dot(a_ref[0], wh_ref[0], preferred_element_type=jnp.float32)


def aggregate_pallas(a_stack, wh_stack, *, tile_dst, tile_src, vmem_limit):
    R, n_dst_p, n_src_p = a_stack.shape
    d_out_p = wh_stack.shape[2]
    assert n_dst_p % tile_dst == 0 and n_src_p % tile_src == 0

    n_i = n_dst_p // tile_dst
    grid = (n_i, R, n_src_p // tile_src)

    flops = 2 * R * n_dst_p * n_src_p * d_out_p
    # A is streamed exactly once; Wh is re-streamed once per dst tile.
    bytes_accessed = 2 * a_stack.size + 2 * wh_stack.size * n_i + 4 * n_dst_p * d_out_p

    return pl.pallas_call(
        _agg_kernel,
        out_shape=jax.ShapeDtypeStruct((n_dst_p, d_out_p), jnp.float32),
        grid_spec=pltpu.PrefetchScalarGridSpec(
            num_scalar_prefetch=0,
            grid=grid,
            in_specs=[
                pl.BlockSpec((1, tile_dst, tile_src), lambda i, r, s: (r, i, s)),
                pl.BlockSpec((1, tile_src, d_out_p), lambda i, r, s: (r, s, 0)),
            ],
            out_specs=pl.BlockSpec((tile_dst, d_out_p), lambda i, r, s: (i, 0)),
        ),
        compiler_params=pltpu.CompilerParams(
            # dst-tile axis shards across TensorCores (v7x megacore);
            # relation + src-contraction axes are the resident reduction.
            dimension_semantics=("parallel", "arbitrary", "arbitrary"),
            vmem_limit_bytes=vmem_limit,
        ),
        cost_estimate=pl.CostEstimate(
            flops=flops, transcendentals=0, bytes_accessed=bytes_accessed
        ),
    )(a_stack, wh_stack)


# --------------------------------------------------------------------------
# Layer wrapper
# --------------------------------------------------------------------------
def build_mean_adj(src, dst, n_src, n_dst):
    """A_norm[d, s] = (#edges s->d) / in_degree(d), 0 if in_degree(d)==0."""
    a = jnp.zeros((n_dst, n_src), jnp.float32).at[dst, src].add(1.0)
    deg = a.sum(axis=1, keepdims=True)
    return jnp.where(deg > 0, a / jnp.maximum(deg, 1.0), 0.0)


def hetero_rgcn_layer(feat_dict, params, adj, canonical_etypes, n_nodes, out_size):
    """Full layer forward: two fused Pallas calls per destination node type."""
    vmem_limit = _vmem_limit_bytes()
    out = {}
    dst_types = sorted({d for (_, _, d) in canonical_etypes})
    for dsttype in dst_types:
        rels = [
            (st, et)
            for (st, et, dt) in canonical_etypes
            if dt == dsttype and st in feat_dict
        ]
        if not rels:
            continue
        n_dst = n_nodes[dsttype]
        in_sizes = [feat_dict[st].shape[1] for st, _ in rels]

        # ---- padded shapes / tiles (lane-dense, (8,128)-aligned) ----------
        d_in_p = _round_up(max(in_sizes), 128)
        d_out_p = _round_up(out_size, 128)  # out-tile axis collapsed: one j step
        n_src_max = max(n_nodes[st] for st, _ in rels)
        # Large contraction tile (up to 2048): working set (2xA + 2xWh + out)
        # stays a few MiB, far under the v7x 64 MiB/TC VMEM, while amortizing
        # per-grid-step overhead.
        tile_src = min(_round_up(n_src_max, 128), 2048)
        n_src_p = _round_up(n_src_max, tile_src)
        # 16-multiple dst tile keeps bf16 sublane packing happy; up to 512.
        tile_dst = min(_round_up(n_dst, 16), 512)
        n_dst_p = _round_up(n_dst, tile_dst)
        # Give the v7x megacore at least two dst tiles when the graph allows it.
        if n_dst_p == tile_dst and tile_dst >= 32 and tile_dst % 32 == 0:
            tile_dst //= 2
            n_dst_p = _round_up(n_dst, tile_dst)

        # TODO(synk): for production graphs, (a) group relations by source type
        # (or use scalar-prefetched offsets/BoundedSlice) instead of zero-padding
        # every relation to n_src_max, and (b) pass a per-(r, i) nonzero-block
        # list via PrefetchScalarGridSpec so all-zero A tiles skip DMA + matmul.
        x_stack = jnp.stack(
            [_pad_2d(feat_dict[st], n_src_p, d_in_p) for st, _ in rels]
        ).astype(jnp.bfloat16)
        w_stack = jnp.stack(
            [_pad_2d(params[et][0], d_in_p, d_out_p) for _, et in rels]
        ).astype(jnp.bfloat16)
        a_stack = jnp.stack(
            [_pad_2d(adj[et], n_dst_p, n_src_p) for _, et in rels]
        ).astype(jnp.bfloat16)

        # Kernel 1: per-relation projection (computed once per src row).
        wh_stack = project_features_pallas(
            x_stack, w_stack, tile_src=tile_src, vmem_limit=vmem_limit
        )
        # Kernel 2: mean aggregation + cross-relation sum.
        y_pad = aggregate_pallas(
            a_stack, wh_stack,
            tile_dst=tile_dst, tile_src=tile_src, vmem_limit=vmem_limit,
        )
        y = y_pad[:n_dst, :out_size]

        # Bias folded out of the kernel: A_norm rows sum to 1 (0 for deg-0 dst),
        # so A @ (X W + b) = A @ (X W) + 1[deg>0] * b.  Added here in f32.
        ind = jnp.stack(
            [(adj[et].sum(axis=1) > 0).astype(jnp.float32) for _, et in rels]
        )  # [R, n_dst]
        bias = jnp.stack([params[et][1] for _, et in rels])  # [R, out]
        out[dsttype] = y + jnp.einsum("rn,rd->nd", ind, bias)
    return out


if __name__ == "__main__":
    key = jax.random.PRNGKey(0)

    # --- synthetic heterograph -------------------------------------------
    in_size, out_size = 32, 32
    n_user, n_item = 16, 24
    n_nodes = {"user": n_user, "item": n_item}

    # canonical etypes: (srctype, etype, dsttype)
    canonical_etypes = [
        ("user", "follows", "user"),
        ("item", "bought_by", "user"),
        ("user", "buys", "item"),
    ]
    n_edges = {"follows": 40, "bought_by": 50, "buys": 60}

    # deterministic node features
    key, ku, ki = jax.random.split(key, 3)
    feat_dict = {
        "user": jax.random.normal(ku, (n_user, in_size), jnp.float32),
        "item": jax.random.normal(ki, (n_item, in_size), jnp.float32),
    }

    # deterministic per-etype Linear params (weight [in, out], bias [out])
    params = {}
    for _, etype, _ in canonical_etypes:
        key, kw, kb = jax.random.split(key, 3)
        params[etype] = (
            0.1 * jax.random.normal(kw, (in_size, out_size), jnp.float32),
            0.1 * jax.random.normal(kb, (out_size,), jnp.float32),
        )

    # deterministic edges + mean-normalized adjacencies
    adj = {}
    for srctype, etype, dsttype in canonical_etypes:
        key, ks, kd = jax.random.split(key, 3)
        e = n_edges[etype]
        src = jax.random.randint(ks, (e,), 0, n_nodes[srctype])
        dst = jax.random.randint(kd, (e,), 0, n_nodes[dsttype])
        adj[etype] = build_mean_adj(src, dst, n_nodes[srctype], n_nodes[dsttype])

    # --- Pallas forward ---------------------------------------------------
    out = hetero_rgcn_layer(
        feat_dict, params, adj, canonical_etypes, n_nodes, out_size
    )

    # --- pure-JAX f32 reference (same math, outside Pallas) ---------------
    ref = {}
    for dsttype in out:
        acc = jnp.zeros((n_nodes[dsttype], out_size), jnp.float32)
        for st, et, dt in canonical_etypes:
            if dt != dsttype or st not in feat_dict:
                continue
            wh = feat_dict[st] @ params[et][0] + params[et][1]
            acc = acc + adj[et] @ wh
        ref[dsttype] = acc

    for dsttype in out:
        jax.block_until_ready(out[dsttype])
        assert out[dsttype].shape == (n_nodes[dsttype], out_size)
        # bf16 inputs -> loosen tolerance vs. the f32 reference.
        assert jnp.allclose(out[dsttype], ref[dsttype], rtol=3e-2, atol=3e-2), dsttype

    print("KERNEL_OK")
</pallas_src>

<mosaic_0001>
module attributes {stable_mosaic.version = 11 : i64} {
  func.func @_wh_kernel(%arg0: i32, %arg1: i32, %arg2: memref<1x128x128xbf16, #tpu.memory_space<vmem>>, %arg3: memref<1x128x128xbf16, #tpu.memory_space<vmem>>, %arg4: memref<1x128x128xbf16, #tpu.memory_space<vmem>>) attributes {dimension_semantics = [#tpu.dimension_semantics<parallel>, #tpu.dimension_semantics<parallel>], iteration_bounds = array<i64: 1, 1>, scalar_prefetch = 0 : i64, scratch_operands = 0 : i64, tpu.core_type = #tpu.core_type<tc>, window_params = [{transform_indices = @transform_0, window_bounds = array<i64: 1, 128, 128>}, {transform_indices = @transform_1, window_bounds = array<i64: 1, 128, 128>}, {transform_indices = @transform_2, window_bounds = array<i64: 1, 128, 128>}]} {
    %c0 = arith.constant 0 : index
    %c0_0 = arith.constant 0 : index
    %c0_1 = arith.constant 0 : index
    %0 = vector.load %arg2[%c0, %c0_0, %c0_1] : memref<1x128x128xbf16, #tpu.memory_space<vmem>>, vector<1x128x128xbf16>
    %1 = vector.shape_cast %0 : vector<1x128x128xbf16> to vector<128x128xbf16>
    %c0_2 = arith.constant 0 : index
    %c0_3 = arith.constant 0 : index
    %c0_4 = arith.constant 0 : index
    %2 = vector.load %arg3[%c0_2, %c0_3, %c0_4] : memref<1x128x128xbf16, #tpu.memory_space<vmem>>, vector<1x128x128xbf16>
    %3 = vector.shape_cast %2 : vector<1x128x128xbf16> to vector<128x128xbf16>
    %cst = arith.constant dense<0.000000e+00> : vector<128x128xf32>
    %4 = tpu.matmul %1, %3, %cst {dimension_numbers = #tpu.dot_dimension_numbers<[1], [0], [0], [1], [0, 0, 1, 1], [], []>} : vector<128x128xbf16>, vector<128x128xbf16>, vector<128x128xf32> -> vector<128x128xf32>
    %5 = arith.truncf %4 : vector<128x128xf32> to vector<128x128xbf16>
    %c0_5 = arith.constant 0 : index
    %c0_6 = arith.constant 0 : index
    %c0_7 = arith.constant 0 : index
    %6 = vector.load %arg4[%c0_5, %c0_6, %c0_7] : memref<1x128x128xbf16, #tpu.memory_space<vmem>>, vector<1x128x128xbf16>
    %7 = vector.shape_cast %6 : vector<1x128x128xbf16> to vector<128x128xbf16>
    %8 = vector.shape_cast %5 : vector<128x128xbf16> to vector<1x128x128xbf16>
    tpu.vector_store %arg4[%c0_5, %c0_6, %c0_7], %8 {strides = array<i32>} : memref<1x128x128xbf16, #tpu.memory_space<vmem>>, vector<1x128x128xbf16>,
    return
  }
  func.func @transform_0(%arg0: i32, %arg1: i32) -> (i32, i32, i32) {
    %c0_i32 = arith.constant 0 : i32
    %c0_i32_0 = arith.constant 0 : i32
    return %arg0, %arg1, %c0_i32 : i32, i32, i32
  }
  func.func @transform_1(%arg0: i32, %arg1: i32) -> (i32, i32, i32) {
    %c0_i32 = arith.constant 0 : i32
    %c0_i32_0 = arith.constant 0 : i32
    %c0_i32_1 = arith.constant 0 : i32
    return %arg0, %c0_i32, %c0_i32_0 : i32, i32, i32
  }
  func.func @transform_2(%arg0: i32, %arg1: i32) -> (i32, i32, i32) {
    %c0_i32 = arith.constant 0 : i32
    %c0_i32_0 = arith.constant 0 : i32
    return %arg0, %arg1, %c0_i32 : i32, i32, i32
  }
}

</mosaic_0001>

<llo_original>
// kernel: tpu_custom_call.1
$region0: #{tpu_custom_call.1}
  #allocation0 [shape = 'u32[]', space=smem, size = 0x4, offset = 0x4, fixed_abs, tag = 'smem constant byte address 0x4 - core index']
  #allocation1 [shape = 'u32[144,128]{1,0:T(1,128)}', space=vmem, size = 0x12000, scoped, tag = 'internal scratch']
  %s0 = inlined_call_operand.hbm [shape: bf16[1,128,128], index: 0, kind: input, shape index: {}]
  %s1 = inlined_call_operand.hbm [shape: bf16[1,128,128], index: 1, kind: input, shape index: {}]
  %s2 = inlined_call_operand.hbm [shape: bf16[1,128,128], index: 2, kind: output, shape index: {}]
  %s3 = sld [smem:[#allocation0]]
  $region26: #{tpu_custom_call.1} parent=0
    _
  %s5 = ssub.s32 1, %s3
  %s6 = scalar_select 0, %s5, %s3
  $region1: #{tpu_custom_call.1} parent=0
    #allocation2 [shape = 'u8[32768]{0}', space=vmem, size = 0x8000, scoped, tag = 'input window, operand 0, single buffered']
    #allocation3 [shape = 's32[1]{0}', space=sflag, size = 0x4, scoped, tag = 'scoped memory for tpu_custom_call.1']
    #allocation4 [shape = 's32[1]{0}', space=sflag, size = 0x4, scoped, tag = 'scoped memory for tpu_custom_call.1']
    #allocation5 [shape = 'u8[32768]{0}', space=vmem, size = 0x8000, scoped, tag = 'input window, operand 1, single buffered']
    #allocation6 [shape = 's32[1]{0}', space=sflag, size = 0x4, scoped, tag = 'scoped memory for tpu_custom_call.1']
    #allocation7 [shape = 'u8[32768]{0}', space=vmem, size = 0x8000, scoped, tag = 'output window, operand 0, single buffered']
    %7 = vsyncpa [#allocation3], 0
    %8 = vsyncpa [#allocation6], 0
    %9 = vsyncpa [#allocation4], 0
    // Predicated region
    $region2: #{tpu_custom_call.1} parent=1 // pred_check
      _
    $region3: #{tpu_custom_call.1} parent=1 // pred_check_branch
      %11 = sbr.rel (0) target = $region5
    $region4: #{tpu_custom_call.1} parent=1 // pred_region
      %s13 = ssub.s32 1024, 1024
      %14 = vsyncadd [#allocation3], %s13
      %s15 = sshll.u32 [#allocation2], 4
      %s16 = int_to_ptr.vmem [resolvable:$true] %s15
      %21 = dma.hbm_to_vmem [thread:$0]  %s0, 1024, %s16, [#allocation3], 64, 64, 4
    $region5: #{tpu_custom_call.1} parent=1 // pred_fallthru
      _
    // Predicated region
    $region6: #{tpu_custom_call.1} parent=1 // pred_check
      _
    $region7: #{tpu_custom_call.1} parent=1 // pred_check_branch
      %23 = sbr.rel (0) target = $region9
    $region8: #{tpu_custom_call.1} parent=1 // pred_region
      %s25 = ssub.s32 1024, 1024
      %26 = vsyncadd [#allocation6], %s25
      %s27 = sshll.u32 [#allocation5], 4
      %s28 = int_to_ptr.vmem [resolvable:$true] %s27
      %33 = dma.hbm_to_vmem [thread:$0]  %s1, 1024, %s28, [#allocation6], 64, 64, 4
    $region9: #{tpu_custom_call.1} parent=1 // pred_fallthru
      _
    // Predicated region
    $region10: #{tpu_custom_call.1} parent=1 // pred_check
      _
    $region11: #{tpu_custom_call.1} parent=1 // pred_check_branch
      %35 = sbr.rel (0) target = $region13
    $region12: #{tpu_custom_call.1} parent=1 // pred_region
      %36 = dma.done [#allocation3], 1024
    $region13: #{tpu_custom_call.1} parent=1 // pred_fallthru
      _
    // Predicated region
    $region14: #{tpu_custom_call.1} parent=1 // pred_check
      _
    $region15: #{tpu_custom_call.1} parent=1 // pred_check_branch
      %38 = sbr.rel (0) target = $region17
    $region16: #{tpu_custom_call.1} parent=1 // pred_region
      %39 = dma.done [#allocation6], 1024
    $region17: #{tpu_custom_call.1} parent=1 // pred_fallthru
      _
    %v41 = vld [vmem:[#allocation2] sm:$0xf]
    %v42 = vld [vmem:[#allocation2 + $0x4] sm:$0xf]
    %v43 = vld [vmem:[#allocation2 + $0x8] sm:$0xf]
    %v44 = vld [vmem:[#allocation2 + $0xc] sm:$0xf]
    %v45 = vld [vmem:[#allocation2 + $0x10] sm:$0xf]
    %v46 = vld [vmem:[#allocation2 + $0x14] sm:$0xf]
    %v47 = vld [vmem:[#allocation2 + $0x18] sm:$0xf]
    %v48 = vld [vmem:[#allocation2 + $0x1c] sm:$0xf]
    %v49 = vld [vmem:[#allocation2 + $0x20] sm:$0xf]
    %v50 = vld [vmem:[#allocation2 + $0x24] sm:$0xf]
    %v51 = vld [vmem:[#allocation2 + $0x28] sm:$0xf]
    %v52 = vld [vmem:[#allocation2 + $0x2c] sm:$0xf]
    %v53 = vld [vmem:[#allocation2 + $0x30] sm:$0xf]
    %v54 = vld [vmem:[#allocation2 + $0x34] sm:$0xf]
    %v55 = vld [vmem:[#allocation2 + $0x38] sm:$0xf]
    %v56 = vld [vmem:[#allocation2 + $0x3c] sm:$0xf]
    %v57 = vld [vmem:[#allocation5] sm:$0xf]
    %v58 = vld [vmem:[#allocation5 + $0x4] sm:$0xf]
    %v59 = vld [vmem:[#allocation5 + $0x8] sm:$0xf]
    %v60 = vld [vmem:[#allocation5 + $0xc] sm:$0xf]
    %v61 = vld [vmem:[#allocation5 + $0x10] sm:$0xf]
    %v62 = vld [vmem:[#allocation5 + $0x14] sm:$0xf]
    %v63 = vld [vmem:[#allocation5 + $0x18] sm:$0xf]
    %v64 = vld [vmem:[#allocation5 + $0x1c] sm:$0xf]
    %v65 = vld [vmem:[#allocation5 + $0x20] sm:$0xf]
    %v66 = vld [vmem:[#allocation5 + $0x24] sm:$0xf]
    %v67 = vld [vmem:[#allocation5 + $0x28] sm:$0xf]
    %v68 = vld [vmem:[#allocation5 + $0x2c] sm:$0xf]
    %v69 = vld [vmem:[#allocation5 + $0x30] sm:$0xf]
    %v70 = vld [vmem:[#allocation5 + $0x34] sm:$0xf]
    %v71 = vld [vmem:[#allocation5 + $0x38] sm:$0xf]
    %v72 = vld [vmem:[#allocation5 + $0x3c] sm:$0xf]
    %v89 = vunpack.c.l.b16 %v41
    %v90 = vunpack.c.l.b16 %v42
    %v91 = vunpack.c.l.b16 %v43
    %v92 = vunpack.c.l.b16 %v44
    %v93 = vunpack.c.l.b16 %v45
    %v94 = vunpack.c.l.b16 %v46
    %v95 = vunpack.c.l.b16 %v47
    %v96 = vunpack.c.l.b16 %v48
    %v97 = vunpack.c.l.b16 %v49
    %v98 = vunpack.c.l.b16 %v50
    %v99 = vunpack.c.l.b16 %v51
    %v100 = vunpack.c.l.b16 %v52
    %v101 = vunpack.c.l.b16 %v53
    %v102 = vunpack.c.l.b16 %v54
    %v103 = vunpack.c.l.b16 %v55
    %v104 = vunpack.c.l.b16 %v56
    %v105 = vpack.c.b16 %v90, %v89
    %v106 = vpack.c.b16 %v92, %v91
    %v107 = vpack.c.b16 %v94, %v93
    %v108 = vpack.c.b16 %v96, %v95
    %v109 = vpack.c.b16 %v98, %v97
    %v110 = vpack.c.b16 %v100, %v99
    %v111 = vpack.c.b16 %v102, %v101
    %v112 = vpack.c.b16 %v104, %v103
    %v137 = vunpack.c.l.b16 %v57
    %v138 = vunpack.c.l.b16 %v58
    %v139 = vunpack.c.l.b16 %v59
    %v140 = vunpack.c.l.b16 %v60
    %v141 = vunpack.c.l.b16 %v61
    %v142 = vunpack.c.l.b16 %v62
    %v143 = vunpack.c.l.b16 %v63
    %v144 = vunpack.c.l.b16 %v64
    %v145 = vunpack.c.l.b16 %v65
    %v146 = vunpack.c.l.b16 %v66
    %v147 = vunpack.c.l.b16 %v67
    %v148 = vunpack.c.l.b16 %v68
    %v149 = vunpack.c.l.b16 %v69
    %v150 = vunpack.c.l.b16 %v70
    %v151 = vunpack.c.l.b16 %v71
    %v152 = vunpack.c.l.b16 %v72
    %v153 = vpack.c.b16 %v138, %v137
    %v154 = vpack.c.b16 %v140, %v139
    %v155 = vpack.c.b16 %v142, %v141
    %v156 = vpack.c.b16 %v144, %v143
    %v157 = vpack.c.b16 %v146, %v145
    %v158 = vpack.c.b16 %v148, %v147
    %v159 = vpack.c.b16 %v150, %v149
    %v160 = vpack.c.b16 %v152, %v151
    %169 = vmatprep.subr.bf16.mxu0 0
    %170 = vmatpush1.bf16.msra.mxu0 %v153
    %171 = vmatprep.subr.bf16.mxu0 0
    %172 = vmatpush1.bf16.msra.mxu0 %v154
    %173 = vmatprep.subr.bf16.mxu0 0
    %174 = vmatpush1.bf16.msra.mxu0 %v155
    %175 = vmatprep.subr.bf16.mxu0 0
    %176 = vmatpush1.bf16.msra.mxu0 %v156
    %177 = vmatprep.subr.bf16.mxu0 0
    %178 = vmatpush1.bf16.msra.mxu0 %v157
    %179 = vmatprep.subr.bf16.mxu0 0
    %180 = vmatpush1.bf16.msra.mxu0 %v158
    %181 = vmatprep.subr.bf16.mxu0 0
    %182 = vmatpush1.bf16.msra.mxu0 %v159
    %183 = vmatprep.subr.bf16.mxu0 0
    %184 = vmatpush1.bf16.msra.mxu0 %v160
    %185 = vmatprep.subr.bf16.mxu0 0
    %186 = vmatpush1.bf16.msra.mxu0 0
    %187 = vmatprep.subr.bf16.mxu0 0
    %188 = vmatpush1.bf16.msra.mxu0 0
    %189 = vmatprep.subr.bf16.mxu0 0
    %190 = vmatpush1.bf16.msra.mxu0 0
    %191 = vmatprep.subr.bf16.mxu0 0
    %192 = vmatpush1.bf16.msra.mxu0 0
    %193 = vmatprep.subr.bf16.mxu0 0
    %194 = vmatpush1.bf16.msra.mxu0 0
    %195 = vmatprep.subr.bf16.mxu0 0
    %196 = vmatpush1.bf16.msra.mxu0 0
    %197 = vmatprep.subr.bf16.mxu0 0
    %198 = vmatpush1.bf16.msra.mxu0 0
    %199 = vmatprep.subr.bf16.mxu0 0
    %200 = vmatpush1.bf16.msra.mxu0 0
    %201 = vmatprep.mubr.bf16.mxu0 0
    %202 = vmatmul.mubr.bf16.gmra.mrb[0].mxu0 %v105
    %v203 = vpop.f32.mrb[0].mxu0
    %v204 = vadd.f32 0.0, %v203
    %v205 = vpop.f32.mrb[0].mxu0
    %v206 = vpop.f32.mrb[0].mxu0
    %v207 = vadd.f32 0.0, %v206
    %v208 = vpop.f32.mrb[0].mxu0
    %209 = vmatprep.mubr.bf16.mxu0 0
    %210 = vmatmul.mubr.bf16.gmra.mrb[0].mxu0 %v106
    %v211 = vpop.f32.mrb[0].mxu0
    %v212 = vadd.f32 0.0, %v211
    %v213 = vpop.f32.mrb[0].mxu0
    %v214 = vpop.f32.mrb[0].mxu0
    %v215 = vadd.f32 0.0, %v214
    %v216 = vpop.f32.mrb[0].mxu0
    %217 = vmatprep.mubr.bf16.mxu0 0
    %218 = vmatmul.mubr.bf16.gmra.mrb[0].mxu0 %v107
    %v219 = vpop.f32.mrb[0].mxu0
    %v220 = vadd.f32 0.0, %v219
    %v221 = vpop.f32.mrb[0].mxu0
    %v222 = vpop.f32.mrb[0].mxu0
    %v223 = vadd.f32 0.0, %v222
    %v224 = vpop.f32.mrb[0].mxu0
    %225 = vmatprep.mubr.bf16.mxu0 0
    %226 = vmatmul.mubr.bf16.gmra.mrb[0].mxu0 %v108
    %v227 = vpop.f32.mrb[0].mxu0
    %v228 = vadd.f32 0.0, %v227
    %v229 = vpop.f32.mrb[0].mxu0
    %v230 = vpop.f32.mrb[0].mxu0
    %v231 = vadd.f32 0.0, %v230
    %v232 = vpop.f32.mrb[0].mxu0
    %233 = vmatprep.mubr.bf16.mxu0 0
    %234 = vmatmul.mubr.bf16.gmra.mrb[0].mxu0 %v109
    %v235 = vpop.f32.mrb[0].mxu0
    %v236 = vadd.f32 0.0, %v235
    %v237 = vpop.f32.mrb[0].mxu0
    %v238 = vpop.f32.mrb[0].mxu0
    %v239 = vadd.f32 0.0, %v238
    %v240 = vpop.f32.mrb[0].mxu0
    %241 = vmatprep.mubr.bf16.mxu0 0
    %242 = vmatmul.mubr.bf16.gmra.mrb[0].mxu0 %v110
    %v243 = vpop.f32.mrb[0].mxu0
    %v244 = vadd.f32 0.0, %v243
    %v245 = vpop.f32.mrb[0].mxu0
    %v246 = vpop.f32.mrb[0].mxu0
    %v247 = vadd.f32 0.0, %v246
    %v248 = vpop.f32.mrb[0].mxu0
    %249 = vmatprep.mubr.bf16.mxu0 0
    %250 = vmatmul.mubr.bf16.gmra.mrb[0].mxu0 %v111
    %v251 = vpop.f32.mrb[0].mxu0
    %v252 = vadd.f32 0.0, %v251
    %v253 = vpop.f32.mrb[0].mxu0
    %v254 = vpop.f32.mrb[0].mxu0
    %v255 = vadd.f32 0.0, %v254
    %v256 = vpop.f32.mrb[0].mxu0
    %257 = vmatprep.mubr.bf16.mxu0 0
    %258 = vmatmul.mubr.bf16.gmra.mrb[0].mxu0 %v112
    %v259 = vpop.f32.mrb[0].mxu0
    %v260 = vadd.f32 0.0, %v259
    %v261 = vpop.f32.mrb[0].mxu0
    %v262 = vpop.f32.mrb[0].mxu0
    %v263 = vadd.f32 0.0, %v262
    %v264 = vpop.f32.mrb[0].mxu0
    %265 = vdwg.mxu0
    %v266 = vpack.c.bf16 %v207, %v204
    %v267 = vpack.c.bf16 %v215, %v212
    %v268 = vpack.c.bf16 %v223, %v220
    %v269 = vpack.c.bf16 %v231, %v228
    %v270 = vpack.c.bf16 %v239, %v236
    %v271 = vpack.c.bf16 %v247, %v244
    %v272 = vpack.c.bf16 %v255, %v252
    %v273 = vpack.c.bf16 %v263, %v260
    %v282 = vunpack.c.l.b16 %v266
    %v283 = vunpack.c.h.b16 %v266
    %v284 = vunpack.c.l.b16 %v267
    %v285 = vunpack.c.h.b16 %v267
    %v286 = vunpack.c.l.b16 %v268
    %v287 = vunpack.c.h.b16 %v268
    %v288 = vunpack.c.l.b16 %v269
    %v289 = vunpack.c.h.b16 %v269
    %v290 = vunpack.c.l.b16 %v270
    %v291 = vunpack.c.h.b16 %v270
    %v292 = vunpack.c.l.b16 %v271
    %v293 = vunpack.c.h.b16 %v271
    %v294 = vunpack.c.l.b16 %v272
    %v295 = vunpack.c.h.b16 %v272
    %v296 = vunpack.c.l.b16 %v273
    %v297 = vunpack.c.h.b16 %v273
    %v298 = vpack.c.b16 %v282, %v282
    %v299 = vpack.c.b16 %v283, %v283
    %v300 = vpack.c.b16 %v284, %v284
    %v301 = vpack.c.b16 %v285, %v285
    %v302 = vpack.c.b16 %v286, %v286
    %v303 = vpack.c.b16 %v287, %v287
    %v304 = vpack.c.b16 %v288, %v288
    %v305 = vpack.c.b16 %v289, %v289
    %v306 = vpack.c.b16 %v290, %v290
    %v307 = vpack.c.b16 %v291, %v291
    %v308 = vpack.c.b16 %v292, %v292
    %v309 = vpack.c.b16 %v293, %v293
    %v310 = vpack.c.b16 %v294, %v294
    %v311 = vpack.c.b16 %v295, %v295
    %v312 = vpack.c.b16 %v296, %v296
    %v313 = vpack.c.b16 %v297, %v297
    %330 = vst [vmem:[#allocation7] sm:$0xf] %v298
    %331 = vst [vmem:[#allocation7 + $0x4] sm:$0xf] %v299
    %332 = vst [vmem:[#allocation7 + $0x8] sm:$0xf] %v300
    %333 = vst [vmem:[#allocation7 + $0xc] sm:$0xf] %v301
    %334 = vst [vmem:[#allocation7 + $0x10] sm:$0xf] %v302
    %335 = vst [vmem:[#allocation7 + $0x14] sm:$0xf] %v303
    %336 = vst [vmem:[#allocation7 + $0x18] sm:$0xf] %v304
    %337 = vst [vmem:[#allocation7 + $0x1c] sm:$0xf] %v305
    %338 = vst [vmem:[#allocation7 + $0x20] sm:$0xf] %v306
    %339 = vst [vmem:[#allocation7 + $0x24] sm:$0xf] %v307
    %340 = vst [vmem:[#allocation7 + $0x28] sm:$0xf] %v308
    %341 = vst [vmem:[#allocation7 + $0x2c] sm:$0xf] %v309
    %342 = vst [vmem:[#allocation7 + $0x30] sm:$0xf] %v310
    %343 = vst [vmem:[#allocation7 + $0x34] sm:$0xf] %v311
    %344 = vst [vmem:[#allocation7 + $0x38] sm:$0xf] %v312
    %345 = vst [vmem:[#allocation7 + $0x3c] sm:$0xf] %v313
    // Predicated region
    $region18: #{tpu_custom_call.1} parent=1 // pred_check
      _
    $region19: #{tpu_custom_call.1} parent=1 // pred_check_branch
      %347 = sbr.rel (0) target = $region21
    $region20: #{tpu_custom_call.1} parent=1 // pred_region
      %s349 = ssub.s32 1024, 1024
      %350 = vsyncadd [#allocation4], %s349
      %s351 = sshll.u32 [#allocation7], 4
      %s352 = int_to_ptr.vmem [resolvable:$true] %s351
      %357 = dma.vmem_to_hbm [thread:$0]  %s352, 1024, %s2, [#allocation4], 64, 64, 4
    $region21: #{tpu_custom_call.1} parent=1 // pred_fallthru
      _
    // Predicated region
    $region22: #{tpu_custom_call.1} parent=1 // pred_check
      _
    $region23: #{tpu_custom_call.1} parent=1 // pred_check_branch
      %359 = sbr.rel (0) target = $region25
    $region24: #{tpu_custom_call.1} parent=1 // pred_region
      %360 = dma.done [#allocation4], 1024
    $region25: #{tpu_custom_call.1} parent=1 // pred_fallthru
      _
    %361 = vsyncpa [#allocation3], 1
    %362 = vsyncpa [#allocation6], 1
    %363 = vsyncpa [#allocation4], 1

</llo_original>
